<compile_context>
chip_gen: v5e
topology: v5e:2x2
jax: 0.10.0
libtpu: 0.0.40
codegen_flags: <defaults>
</compile_context>

<pallas_src>
import functools

import numpy as np
import jax
import jax.numpy as jnp
from jax.experimental import pallas as pl
from jax.experimental.pallas import tpu as pltpu

_LANES = 128
_SUBLANES = 8
_R_TILE_MAX = 1024   # rows per grid step -> 3 x 512 KiB input blocks


def _round_up(x: int, k: int) -> int:
    return ((x + k - 1) // k) * k


def _tiling(n_rows: int):
    """(r_tile, r_pad): rows per grid step and total padded rows."""
    r_tile = min(_R_TILE_MAX, _round_up(max(n_rows, 1), _SUBLANES))
    r_pad = _round_up(max(n_rows, 1), r_tile)
    return r_tile, r_pad


def _mse_evs_kernel(evr_ref, evi_ref, yt_ref, out_ref, acc_ref):
    """One grid step processes r_tile lane-dense rows.

    evr_ref / evi_ref : VMEM (r_tile, 128)  real / imag eigenvalue parts
    yt_ref            : VMEM (r_tile, 128)  matching y_true rows (zero padded)
    out_ref           : VMEM (1, 1)         sum of squared errors (last step)
    acc_ref           : VMEM (8, 128)       fixed-size per-lane partial sums
    """
    i = pl.program_id(0)

    @pl.when(i == 0)
    def _init():
        acc_ref[...] = jnp.zeros_like(acc_ref)

    pr = evr_ref[...]
    pi = evi_ref[...]
    mag = jnp.sqrt(pr * pr + pi * pi)          # get_magnitude(eigvals), VPU
    d = mag - yt_ref[...]                      # zero padding cancels: 0 - 0
    sq = d * d
    # Fold the (r_tile, 128) tile into the fixed (8, 128) accumulator
    # (vreg-aligned reshape; cross-lane reduce deferred to the last step).
    acc_ref[...] += jnp.sum(sq.reshape(-1, _SUBLANES, _LANES), axis=0)

    @pl.when(i == pl.num_programs(0) - 1)
    def _finalize():
        out_ref[...] = jnp.sum(acc_ref[...], keepdims=True)


@functools.partial(jax.jit, static_argnames=("r_tile",))
def _mse_device(evr, evi, yt_slab, idxs, valid_rows, count, *, r_tile):
    """Gather selected y_true rows, run the Pallas kernel, return the mean."""
    r_pad = evr.shape[0]
    s = yt_slab.shape[1]
    m_fixed = idxs.shape[0]

    # Pre-gather the selected frequency rows (device-side, outside the kernel).
    yt_rows = jnp.take(yt_slab, idxs, axis=0).reshape(m_fixed * s, _LANES)
    yt_rows = jnp.pad(yt_rows, ((0, r_pad - m_fixed * s), (0, 0)))
    row_id = jax.lax.broadcasted_iota(jnp.int32, (r_pad, 1), 0)
    yt_rows = jnp.where(row_id < valid_rows, yt_rows, 0.0)   # mask padded rows

    grid = (r_pad // r_tile,)
    sq_sum = pl.pallas_call(
        _mse_evs_kernel,
        out_shape=jax.ShapeDtypeStruct((1, 1), jnp.float32),
        grid=grid,
        in_specs=[
            pl.BlockSpec((r_tile, _LANES), lambda i: (i, 0)),
            pl.BlockSpec((r_tile, _LANES), lambda i: (i, 0)),
            pl.BlockSpec((r_tile, _LANES), lambda i: (i, 0)),
        ],
        out_specs=pl.BlockSpec((1, 1), lambda i: (0, 0)),
        scratch_shapes=[pltpu.VMEM((_SUBLANES, _LANES), jnp.float32)],
        compiler_params=pltpu.CompilerParams(
            dimension_semantics=("arbitrary",)),   # reduction axis, resident out
    )(evr, evi, yt_rows)
    return sq_sum[0, 0] / count


class MSEevs:
    """JAX/Pallas port of the stateful PyTorch MSE_evs module."""

    def __init__(self, iter_num: int, freq_points: int, seed: int = 0):
        self.iter_num = iter_num
        self.max_index = freq_points
        self.evs_per_iteration = float(np.ceil(freq_points / iter_num))
        self.m_fixed = int(np.ceil(freq_points / iter_num))
        # deterministic stand-in for torch.randperm(freq_points)
        self.idxs = np.asarray(
            jax.random.permutation(jax.random.PRNGKey(seed), freq_points)
        ).astype(np.int32)
        self.interval_count = 0
        # cached lane-dense y_true slab (y_true constant across iterations).
        # NOTE: keyed on object identity; in-place mutation of the same numpy
        # array will not be detected.
        self._yt_key = None
        self._yt_slab = None

    def _get_indexes(self):
        idx1 = min(int(self.interval_count * self.evs_per_iteration), self.max_index - 1)
        idx2 = min(int((self.interval_count + 1) * self.evs_per_iteration), self.max_index)
        sel = self.idxs[idx1:idx2]
        self.interval_count = (self.interval_count + 1) % self.iter_num
        return sel

    def _y_true_slab(self, y_true):
        if self._yt_slab is not None and self._yt_key is y_true:
            return self._yt_slab
        yt = jnp.asarray(y_true, jnp.float32)
        b, f, n = yt.shape
        bn = b * n
        s = max(1, (bn + _LANES - 1) // _LANES)
        yt = jnp.transpose(yt, (1, 0, 2)).reshape(f, bn)
        yt = jnp.pad(yt, ((0, 0), (0, s * _LANES - bn)))
        slab = yt.reshape(f, s, _LANES)
        self._yt_key = y_true
        self._yt_slab = slab
        return slab

    def __call__(self, y_pred, y_true):
        # y_pred: (B, F, N, N) complex64 ; y_true: (B, F, N) float32
        idxs = np.asarray(self._get_indexes(), np.int32)    # (m_act,)
        m_act = int(idxs.shape[0])

        y_pred = jnp.asarray(y_pred)
        b, f, n, _ = y_pred.shape
        bn = b * n
        s = max(1, (bn + _LANES - 1) // _LANES)
        r_tile, r_pad = _tiling(self.m_fixed * s)

        # Slice the selected frequencies on device BEFORE the device->host pull:
        # only m_act of F rows ever cross the host boundary.
        idxs_dev = jnp.asarray(idxs)
        yp_re = np.asarray(jnp.take(jnp.real(y_pred), idxs_dev, axis=1))
        yp_im = np.asarray(jnp.take(jnp.imag(y_pred), idxs_dev, axis=1))
        yp_sel = (yp_re + 1j * yp_im).astype(np.complex64)  # (B, m_act, N, N)

        # TODO(synk): general complex eigendecomposition (torch.linalg.eigvals)
        # has no Pallas / TPU-XLA lowering; it is evaluated on the host (numpy).
        evs = np.linalg.eigvals(yp_sel)                      # (B, m_act, N) complex

        # lane-dense (rows, 128) slabs; real/imag as two contiguous arrays
        er = np.zeros((m_act, s * _LANES), np.float32)
        ei = np.zeros((m_act, s * _LANES), np.float32)
        er[:, :bn] = np.transpose(evs.real, (1, 0, 2)).reshape(m_act, bn)
        ei[:, :bn] = np.transpose(evs.imag, (1, 0, 2)).reshape(m_act, bn)
        evr = np.zeros((r_pad, _LANES), np.float32)
        evi = np.zeros((r_pad, _LANES), np.float32)
        evr[: m_act * s] = er.reshape(m_act * s, _LANES)
        evi[: m_act * s] = ei.reshape(m_act * s, _LANES)

        # fixed-length index vector -> a single compiled kernel across intervals
        idxs_fixed = np.zeros((self.m_fixed,), np.int32)
        idxs_fixed[:m_act] = idxs

        yt_slab = self._y_true_slab(y_true)
        return _mse_device(
            jnp.asarray(evr), jnp.asarray(evi), yt_slab,
            jnp.asarray(idxs_fixed),
            jnp.int32(m_act * s),            # valid rows (mask padded gather rows)
            jnp.float32(m_act * bn),         # true element count for the mean
            r_tile=r_tile,
        )


def _reference(y_pred, y_true, idxs):
    evs = np.linalg.eigvals(np.asarray(y_pred)[:, idxs, :, :])
    mag = np.abs(evs)
    true = np.asarray(y_true)[:, idxs, :]
    return np.mean((mag - true) ** 2)


if __name__ == "__main__":
    B, F, N = 2, 16, 4          # batch, frequency points, matrix size
    iter_num = 4                # -> 4 frequency points per iteration

    key = jax.random.PRNGKey(0)
    k1, k2, k3 = jax.random.split(key, 3)
    y_pred = (jax.random.normal(k1, (B, F, N, N), jnp.float32)
              + 1j * jax.random.normal(k2, (B, F, N, N), jnp.float32)
              ).astype(jnp.complex64)
    y_true = jnp.abs(jax.random.normal(k3, (B, F, N), jnp.float32))

    loss_mod = MSEevs(iter_num=iter_num, freq_points=F, seed=0)
    # indices the first call will use (interval_count == 0)
    expected_idxs = np.asarray(loss_mod.idxs[0:loss_mod.m_fixed])

    mse = loss_mod(y_pred, y_true)
    jax.block_until_ready(mse)

    ref = _reference(y_pred, y_true, expected_idxs)
    np.testing.assert_allclose(np.asarray(mse), ref, rtol=1e-4, atol=1e-5)
    print("KERNEL_OK")
</pallas_src>

<mosaic_0001>
module attributes {stable_mosaic.version = 11 : i64} {
  func.func @_mse_evs_kernel(%arg0: i32, %arg1: memref<8x128xf32, #tpu.memory_space<vmem>>, %arg2: memref<8x128xf32, #tpu.memory_space<vmem>>, %arg3: memref<8x128xf32, #tpu.memory_space<vmem>>, %arg4: memref<1x1xf32, #tpu.memory_space<vmem>>, %arg5: memref<8x128xf32, #tpu.memory_space<vmem>>) attributes {dimension_semantics = [#tpu.dimension_semantics<arbitrary>], iteration_bounds = array<i64: 1>, scalar_prefetch = 0 : i64, scratch_operands = 1 : i64, tpu.core_type = #tpu.core_type<tc>, window_params = [{transform_indices = @transform_0, window_bounds = array<i64: 8, 128>}, {transform_indices = @transform_1, window_bounds = array<i64: 8, 128>}, {transform_indices = @transform_2, window_bounds = array<i64: 8, 128>}, {pipeline_mode = #tpu.pipeline_mode<synchronous>, transform_indices = @transform_3, window_bounds = array<i64: 1, 1>}]} {
    %c0_i32 = arith.constant 0 : i32
    %0 = arith.cmpi eq, %arg0, %c0_i32 : i32
    %1 = arith.extui %0 : i1 to i32
    %c0_i32_0 = arith.constant 0 : i32
    %2 = arith.cmpi ne, %1, %c0_i32_0 : i32
    scf.if %2 {
      %cst_12 = arith.constant 0.000000e+00 : f32
      %20 = vector.broadcast %cst_12 : f32 to vector<8x128xf32>
      %c0_13 = arith.constant 0 : index
      %c0_14 = arith.constant 0 : index
      %21 = vector.load %arg5[%c0_13, %c0_14] : memref<8x128xf32, #tpu.memory_space<vmem>>, vector<8x128xf32>
      tpu.vector_store %arg5[%c0_13, %c0_14], %20 {strides = array<i32>} : memref<8x128xf32, #tpu.memory_space<vmem>>, vector<8x128xf32>,
    } else {
    }
    %c0 = arith.constant 0 : index
    %c0_1 = arith.constant 0 : index
    %3 = vector.load %arg1[%c0, %c0_1] : memref<8x128xf32, #tpu.memory_space<vmem>>, vector<8x128xf32>
    %c0_2 = arith.constant 0 : index
    %c0_3 = arith.constant 0 : index
    %4 = vector.load %arg2[%c0_2, %c0_3] : memref<8x128xf32, #tpu.memory_space<vmem>>, vector<8x128xf32>
    %5 = arith.mulf %3, %3 : vector<8x128xf32>
    %6 = arith.mulf %4, %4 : vector<8x128xf32>
    %7 = arith.addf %5, %6 : vector<8x128xf32>
    %8 = math.sqrt %7 : vector<8x128xf32>
    %c0_4 = arith.constant 0 : index
    %c0_5 = arith.constant 0 : index
    %9 = vector.load %arg3[%c0_4, %c0_5] : memref<8x128xf32, #tpu.memory_space<vmem>>, vector<8x128xf32>
    %10 = arith.subf %8, %9 : vector<8x128xf32>
    %11 = arith.mulf %10, %10 : vector<8x128xf32>
    %c0_6 = arith.constant 0 : index
    %c0_7 = arith.constant 0 : index
    %12 = vector.load %arg5[%c0_6, %c0_7] : memref<8x128xf32, #tpu.memory_space<vmem>>, vector<8x128xf32>
    %13 = vector.shape_cast %11 : vector<8x128xf32> to vector<1x8x128xf32>
    %cst = arith.constant dense<0.000000e+00> : vector<8x128xf32>
    %14 = vector.multi_reduction <add>, %13, %cst [0] : vector<1x8x128xf32> to vector<8x128xf32>
    %15 = arith.addf %12, %14 : vector<8x128xf32>
    %c0_8 = arith.constant 0 : index
    %c0_9 = arith.constant 0 : index
    %16 = vector.load %arg5[%c0_8, %c0_9] : memref<8x128xf32, #tpu.memory_space<vmem>>, vector<8x128xf32>
    tpu.vector_store %arg5[%c0_8, %c0_9], %15 {strides = array<i32>} : memref<8x128xf32, #tpu.memory_space<vmem>>, vector<8x128xf32>,
    %c0_i32_10 = arith.constant 0 : i32
    %17 = arith.cmpi eq, %arg0, %c0_i32_10 : i32
    %18 = arith.extui %17 : i1 to i32
    %c0_i32_11 = arith.constant 0 : i32
    %19 = arith.cmpi ne, %18, %c0_i32_11 : i32
    scf.if %19 {
      %c0_12 = arith.constant 0 : index
      %c0_13 = arith.constant 0 : index
      %20 = vector.load %arg5[%c0_12, %c0_13] : memref<8x128xf32, #tpu.memory_space<vmem>>, vector<8x128xf32>
      %21 = vector.shape_cast %20 : vector<8x128xf32> to vector<1x8x128xf32>
      %cst_14 = arith.constant dense<0.000000e+00> : vector<1xf32>
      %22 = vector.multi_reduction <add>, %21, %cst_14 [1, 2] : vector<1x8x128xf32> to vector<1xf32>
      %23 = vector.shape_cast %22 : vector<1xf32> to vector<1x1x1xf32>
      %24 = vector.extract %23[0, 0, 0] : f32 from vector<1x1x1xf32>
      %25 = vector.broadcast %24 : f32 to vector<1x1xf32>
      %c0_15 = arith.constant 0 : index
      %c0_16 = arith.constant 0 : index
      %26 = vector.load %arg4[%c0_15, %c0_16] : memref<1x1xf32, #tpu.memory_space<vmem>>, vector<1x1xf32>
      tpu.vector_store %arg4[%c0_15, %c0_16], %25 {strides = array<i32>} : memref<1x1xf32, #tpu.memory_space<vmem>>, vector<1x1xf32>,
    } else {
    }
    return
  }
  func.func @transform_0(%arg0: i32) -> (i32, i32) {
    %c0_i32 = arith.constant 0 : i32
    %c0_i32_0 = arith.constant 0 : i32
    return %arg0, %c0_i32 : i32, i32
  }
  func.func @transform_1(%arg0: i32) -> (i32, i32) {
    %c0_i32 = arith.constant 0 : i32
    %c0_i32_0 = arith.constant 0 : i32
    return %arg0, %c0_i32 : i32, i32
  }
  func.func @transform_2(%arg0: i32) -> (i32, i32) {
    %c0_i32 = arith.constant 0 : i32
    %c0_i32_0 = arith.constant 0 : i32
    return %arg0, %c0_i32 : i32, i32
  }
  func.func @transform_3(%arg0: i32) -> (i32, i32) {
    %c0_i32 = arith.constant 0 : i32
    %c0_i32_0 = arith.constant 0 : i32
    %c0_i32_1 = arith.constant 0 : i32
    return %c0_i32, %c0_i32_0 : i32, i32
  }
}

</mosaic_0001>

<llo_original>
// kernel: _mse_device.1
$region0: #{_mse_device.1}
  #allocation0 [shape = 'u32[]', space=smem, size = 0x4, offset = 0x4, fixed_abs, tag = 'smem constant byte address 0x4 - core index']
  #allocation1 [shape = 'u32[72,128]{1,0:T(1,128)}', space=vmem, size = 0x9000, scoped, tag = 'internal scratch']
  #allocation2 [shape = 'f32[8,128]{1,0:T(8,128)}', space=vmem, size = 0x1000, scoped, tag = 'scratch operand']
  %s0 = inlined_call_operand.vmem [shape: f32[8,128], index: 0, kind: input, shape index: {}]
  %s1 = inlined_call_operand.vmem [shape: f32[8,128], index: 1, kind: input, shape index: {}]
  %s2 = inlined_call_operand.vmem [shape: f32[8,128], index: 2, kind: input, shape index: {}]
  %s3 = inlined_call_operand.hbm [shape: f32[1,1], index: 3, kind: output, shape index: {}]
  %s4 = sld [smem:[#allocation0]]
  $region30: #{_mse_device.1} parent=0
    _
  %s6 = ssub.s32 1, %s4
  %s7 = scalar_select 0, %s6, %s4
  $region1: #{_mse_device.1} parent=0
    #allocation3 [shape = 'u8[512]{0}', space=vmem, size = 0x400, scoped, tag = 'output window, operand 0, single buffered']
    #allocation4 [shape = 's32[1]{0}', space=sflag, size = 0x4, scoped, tag = 'scoped memory for _mse_device.1']
    %8 = vsyncpa [#allocation4], 0
    // Predicated region
    $region2: #{_mse_device.1} parent=1 // pred_check
      _
    $region3: #{_mse_device.1} parent=1 // pred_check_branch
      %10 = sbr.rel (0) target = $region5
    $region4: #{_mse_device.1} parent=1 // pred_region
      _
    $region5: #{_mse_device.1} parent=1 // pred_fallthru
      _
    // Predicated region
    $region6: #{_mse_device.1} parent=1 // pred_check
      _
    $region7: #{_mse_device.1} parent=1 // pred_check_branch
      %12 = sbr.rel (0) target = $region9
    $region8: #{_mse_device.1} parent=1 // pred_region
      _
    $region9: #{_mse_device.1} parent=1 // pred_fallthru
      _
    // Predicated region
    $region10: #{_mse_device.1} parent=1 // pred_check
      _
    $region11: #{_mse_device.1} parent=1 // pred_check_branch
      %14 = sbr.rel (0) target = $region13
    $region12: #{_mse_device.1} parent=1 // pred_region
      _
    $region13: #{_mse_device.1} parent=1 // pred_fallthru
      _
    %p15 = scmp.eq.s32.totalorder 0, 0
    // Predicated region
    $region14: #{_mse_device.1} parent=1 // pred_check
      %p16 = pneg %p15
    $region15: #{_mse_device.1} parent=1 // pred_check_branch
      %18 = sbr.rel (%p16) target = $region17
    $region16: #{_mse_device.1} parent=1 // pred_region
      %19 = vst [vmem:[#allocation2] sm:$0xff] 0.0
    $region17: #{_mse_device.1} parent=1 // pred_fallthru
      _
    %v20 = vld [vmem:[%s0] sm:$0xff]
    %v21 = vld [vmem:[%s1] sm:$0xff]
    %v22 = vmul.f32 %v20, %v20
    %v23 = vmul.f32 %v21, %v21
    %v24 = vadd.f32 %v22, %v23
    %v25 = vrsqrt.pop %v24
    %v26 = vmul.f32 %v25, %v24
    %v27 = vmul.f32 %v26, %v25
    %v28 = vmul.f32 0.5, %v27
    %v29 = vsub.f32 1.5, %v28
    %v30 = vmul.f32 %v25, %v29
    %v31 = vmul.f32 %v24, %v30
    %vm32 = vcmp.eq.f32.partialorder %v24, inf
    %v33 = vsel %vm32, %v24, %v31
    %vm34 = vcmp.eq.f32.partialorder %v24, 0.0
    %v35 = vand.u32 %v24, 2147483648
    %v36 = vsel %vm34, %v35, %v33
    %v37 = vld [vmem:[%s2] sm:$0xff]
    %v38 = vsub.f32 %v36, %v37
    %v39 = vmul.f32 %v38, %v38
    %v40 = vld [vmem:[#allocation2] sm:$0xff]
    %v41 = vadd.f32 %v39, 0.0
    %v42 = vadd.f32 %v40, %v41
    %43 = vst [vmem:[#allocation2] sm:$0xff] %v42
    // Predicated region
    $region18: #{_mse_device.1} parent=1 // pred_check
      %p44 = pneg %p15
    $region19: #{_mse_device.1} parent=1 // pred_check_branch
      %46 = sbr.rel (%p44) target = $region21
    $region20: #{_mse_device.1} parent=1 // pred_region
      %v47 = vld [vmem:[#allocation2] sm:$0xff]
      %48 = vadd.xlane.f32.xlu0 %v47
      %v49 = vpop.xlane.xlu0 %48
      %v50 = vrot.slane %v49, 4
      %v51 = vadd.f32 %v49, %v50
      %v52 = vrot.slane %v51, 2
      %v53 = vadd.f32 %v51, %v52
      %v54 = vrot.slane %v53, 1
      %v55 = vadd.f32 %v53, %v54
      %s56 = vtos %v55
      %v57 = vstv %s56
      %vm58 = vcmask 0
      %59 = vst.msk [vmem:[#allocation3] sm:$0x1] %vm58, %v57
    $region21: #{_mse_device.1} parent=1 // pred_fallthru
      _
    // Predicated region
    $region22: #{_mse_device.1} parent=1 // pred_check
      _
    $region23: #{_mse_device.1} parent=1 // pred_check_branch
      %61 = sbr.rel (0) target = $region25
    $region24: #{_mse_device.1} parent=1 // pred_region
      %63 = vsyncadd [#allocation4], 0
      %s65 = sshll.u32 [#allocation3], 4
      %s66 = int_to_ptr.vmem [resolvable:$true] %s65
      %s67 = sshll.u32 %s3, 4
      %s68 = int_to_ptr.hbm [resolvable:$true] %s67
      %70 = dma.vmem_to_hbm [thread:$0]  %s66, 16, %s68, [#allocation4]
    $region25: #{_mse_device.1} parent=1 // pred_fallthru
      _
    // Predicated region
    $region26: #{_mse_device.1} parent=1 // pred_check
      _
    $region27: #{_mse_device.1} parent=1 // pred_check_branch
      %72 = sbr.rel (0) target = $region29
    $region28: #{_mse_device.1} parent=1 // pred_region
      %74 = dma.done [#allocation4], 16
    $region29: #{_mse_device.1} parent=1 // pred_fallthru
      _
    %75 = vsyncpa [#allocation4], 1

</llo_original>
